<compile_context>
chip_gen: v5e
topology: v5e:2x2
jax: 0.10.0
libtpu: 0.0.40
codegen_flags: <defaults>
</compile_context>

<pallas_src>
import jax
import jax.numpy as jnp
from jax.experimental import pallas as pl
from jax.experimental.pallas import tpu as pltpu


# ----------------------------------------------------------------------------
# Kernel
# ----------------------------------------------------------------------------
def mlp_kernel(x_ref, p1_ref, p2_ref, p3_ref, o_ref):
    """Transposed 3-layer MLP on one lane tile.

    x_ref : (n_input,   TILE)   batch on lanes
    p1_ref: (n_features, n_input   + 1)   [W1 | b1]
    p2_ref: (n_features, n_features + 1)  [W2 | b2]
    p3_ref: (n_output,   n_features + 1)  [W3 | b3]
    o_ref : (n_output,  TILE)
    """
    n_in = x_ref.shape[0]
    n_feat = p2_ref.shape[0]

    x = x_ref[...]

    # ---- Layer 1 -----------------------------------------------------------
    p1 = p1_ref[...]
    w1 = p1[:, :n_in]                     # (F, n_in)
    b1 = p1[:, n_in:n_in + 1]             # (F, 1)  -> broadcast along lanes
    if n_in == 1:
        # K=1 matmul wastes an MXU push/pop; VPU broadcast multiply-add.
        h1 = w1 * x + b1                  # (F,1)*(1,T) + (F,1) -> (F,T)
    else:
        h1 = jnp.dot(w1, x, preferred_element_type=jnp.float32) + b1
    h1 = jnp.maximum(h1, 0.0)

    # ---- Layer 2: (F,F) @ (F,T) on the MXU ---------------------------------
    p2 = p2_ref[...]
    w2 = p2[:, :n_feat]
    b2 = p2[:, n_feat:n_feat + 1]
    h2 = jnp.dot(w2, h1, preferred_element_type=jnp.float32) + b2
    h2 = jnp.maximum(h2, 0.0)

    # ---- Layer 3: (n_out,F) @ (F,T), lane-dense output ----------------------
    p3 = p3_ref[...]
    w3 = p3[:, :n_feat]
    b3 = p3[:, n_feat:n_feat + 1]
    out = jnp.dot(w3, h2, preferred_element_type=jnp.float32) + b3
    o_ref[...] = out.astype(o_ref.dtype)


# ----------------------------------------------------------------------------
# Tiling / hardware defaults
# ----------------------------------------------------------------------------
def _default_tile_and_vmem():
    """Generation-aware lane-tile cap and scoped-VMEM limit."""
    vmem_phys = 128 << 20
    try:
        info = pltpu.get_tpu_info()
        vmem_phys = int(getattr(info, "vmem_capacity_bytes", vmem_phys))
    except Exception:
        pass
    if vmem_phys <= (64 << 20):
        # v7x: 64 MiB physical per TensorCore -> smaller tiles, 48 MiB scoped.
        return 32768, 48 << 20
    # v5e / v6e: 128 MiB physical -> big tiles, 64 MiB scoped.
    return 65536, 64 << 20


def _choose_tiling(n, tile_cap):
    """Pad batch to a multiple of 128 lanes and derive the lane tile.

    Waste is at most (num_tiles - 1) * 128 columns (not a whole tile).
    """
    n_pad128 = pl.cdiv(n, 128) * 128
    cap = max(128, pl.cdiv(tile_cap, 128) * 128)   # defensive 128-rounding
    num_tiles = pl.cdiv(n_pad128, cap)
    # Keep at least 2 grid steps once there's enough work so v7x megacore
    # (dimension_semantics="parallel") can use both TensorCores; costs one
    # extra ~0.35 us step on single-TC parts, which is negligible.
    if num_tiles == 1 and n_pad128 >= 8192:
        num_tiles = 2
    tile = pl.cdiv(n_pad128 // 128, num_tiles) * 128
    n_pad = num_tiles * tile
    return tile, n_pad, num_tiles


# ----------------------------------------------------------------------------
# Wrapper
# ----------------------------------------------------------------------------
def net_forward(x, params, *, tile_n=None):
    """x: (N, n_input) f32 (PyTorch layout).

    params: dict with packed per-layer weights (PyTorch-native orientation):
      p1: (n_features, n_input    + 1) = [W1 | b1]
      p2: (n_features, n_features + 1) = [W2 | b2]
      p3: (n_output,   n_features + 1) = [W3 | b3]
    Returns (N, n_output) f32, matching torch's Net.forward.
    """
    p1, p2, p3 = params["p1"], params["p2"], params["p3"]
    N, n_input = x.shape
    n_features = p2.shape[0]
    n_output = p3.shape[0]

    default_tile, vmem_limit = _default_tile_and_vmem()
    tile, n_pad, num_tiles = _choose_tiling(N, tile_n or default_tile)

    # Transpose + lane-pad.  For n_input == 1 the transpose is a pure reshape
    # (bit-identical, no transpose HLO); padding uses jnp.pad (no full zero
    # buffer + dynamic-update-slice).
    if n_input == 1:
        xt = x.reshape(1, N)
    else:
        xt = x.T
    xt = jnp.pad(xt, ((0, 0), (0, n_pad - N)))

    full = lambda a: pl.BlockSpec(a.shape, lambda i: (0, 0))   # whole tiny array

    flops = 2 * n_pad * (n_input * n_features
                         + n_features * n_features
                         + n_features * n_output)
    bytes_accessed = 4 * (n_pad * (n_input + n_output)
                          + p1.size + p2.size + p3.size)

    out_t = pl.pallas_call(
        mlp_kernel,
        out_shape=jax.ShapeDtypeStruct((n_output, n_pad), jnp.float32),
        grid=(num_tiles,),
        in_specs=[
            pl.BlockSpec((n_input, tile), lambda i: (0, i)),   # batch-tiled input
            full(p1), full(p2), full(p3),                      # constant-index params
        ],
        out_specs=pl.BlockSpec((n_output, tile), lambda i: (0, i)),
        compiler_params=pltpu.CompilerParams(
            dimension_semantics=("parallel",),                 # megacore-shardable
            vmem_limit_bytes=vmem_limit),
        cost_estimate=pl.CostEstimate(
            flops=flops, transcendentals=0, bytes_accessed=bytes_accessed),
    )(xt, p1, p2, p3)

    # Back to PyTorch layout (N, n_output), dropping the lane padding.
    out_t = out_t[:, :N]
    if n_output == 1:
        return out_t.reshape(N, 1)
    return out_t.T


# ----------------------------------------------------------------------------
# Param init (torch.nn.Linear-style uniform(-1/sqrt(fan_in), 1/sqrt(fan_in)))
# ----------------------------------------------------------------------------
def init_params(key, n_input, n_features, n_output):
    ks = jax.random.split(key, 6)

    def lin(kw, kb, fan_in, fan_out):
        bound = 1.0 / jnp.sqrt(float(fan_in))
        w = jax.random.uniform(kw, (fan_out, fan_in), jnp.float32, -bound, bound)
        b = jax.random.uniform(kb, (fan_out, 1), jnp.float32, -bound, bound)
        return w, b

    w1, b1 = lin(ks[0], ks[1], n_input, n_features)
    w2, b2 = lin(ks[2], ks[3], n_features, n_features)
    w3, b3 = lin(ks[4], ks[5], n_features, n_output)
    return {
        "p1": jnp.concatenate([w1, b1], axis=1),   # (F, n_in+1)
        "p2": jnp.concatenate([w2, b2], axis=1),   # (F, F+1)
        "p3": jnp.concatenate([w3, b3], axis=1),   # (n_out, F+1)
    }


if __name__ == "__main__":
    # Shapes from the original script: x = linspace(-1,1,100).unsqueeze(1) -> (100, 1)
    # with Net(n_input=1, n_features=32, n_output=1).
    N, n_input, n_features, n_output = 100, 1, 32, 1

    key = jax.random.PRNGKey(0)
    params = init_params(key, n_input, n_features, n_output)

    x = jnp.linspace(-1.0, 1.0, N, dtype=jnp.float32).reshape(N, 1)

    y = net_forward(x, params)
    y = jax.block_until_ready(y)

    # Plain-JAX reference of the same forward pass (PyTorch Linear semantics:
    # y = x @ W^T + b), unpacking the packed params.
    def ref(x, p):
        n_in = x.shape[1]
        F = p["p2"].shape[0]
        w1, b1 = p["p1"][:, :n_in], p["p1"][:, n_in]
        w2, b2 = p["p2"][:, :F], p["p2"][:, F]
        w3, b3 = p["p3"][:, :F], p["p3"][:, F]
        h1 = jnp.maximum(x @ w1.T + b1, 0.0)
        h2 = jnp.maximum(h1 @ w2.T + b2, 0.0)
        return h2 @ w3.T + b3

    y_ref = ref(x, params)
    assert y.shape == (N, n_output)
    assert jnp.allclose(y, y_ref, atol=1e-5, rtol=1e-5)

    print("KERNEL_OK")
</pallas_src>

<mosaic_0001>
module attributes {stable_mosaic.version = 11 : i64} {
  func.func @mlp_kernel(%arg0: i32, %arg1: memref<1x128xf32, #tpu.memory_space<vmem>>, %arg2: memref<32x2xf32, #tpu.memory_space<vmem>>, %arg3: memref<32x33xf32, #tpu.memory_space<vmem>>, %arg4: memref<1x33xf32, #tpu.memory_space<vmem>>, %arg5: memref<1x128xf32, #tpu.memory_space<vmem>>) attributes {dimension_semantics = [#tpu.dimension_semantics<parallel>], iteration_bounds = array<i64: 1>, scalar_prefetch = 0 : i64, scratch_operands = 0 : i64, tpu.core_type = #tpu.core_type<tc>, window_params = [{transform_indices = @transform_0, window_bounds = array<i64: 1, 128>}, {pipeline_mode = #tpu.pipeline_mode<synchronous>, transform_indices = @transform_1, window_bounds = array<i64: 32, 2>}, {pipeline_mode = #tpu.pipeline_mode<synchronous>, transform_indices = @transform_2, window_bounds = array<i64: 32, 33>}, {pipeline_mode = #tpu.pipeline_mode<synchronous>, transform_indices = @transform_3, window_bounds = array<i64: 1, 33>}, {transform_indices = @transform_4, window_bounds = array<i64: 1, 128>}]} {
    %c0 = arith.constant 0 : index
    %c0_0 = arith.constant 0 : index
    %0 = vector.load %arg1[%c0, %c0_0] : memref<1x128xf32, #tpu.memory_space<vmem>>, vector<1x128xf32>
    %c0_1 = arith.constant 0 : index
    %c0_2 = arith.constant 0 : index
    %1 = vector.load %arg2[%c0_1, %c0_2] : memref<32x2xf32, #tpu.memory_space<vmem>>, vector<32x2xf32>
    %2 = vector.extract_strided_slice %1 {offsets = [0, 0], sizes = [32, 1], strides = [1, 1]} : vector<32x2xf32> to vector<32x1xf32>
    %3 = vector.extract_strided_slice %1 {offsets = [0, 1], sizes = [32, 1], strides = [1, 1]} : vector<32x2xf32> to vector<32x1xf32>
    %4 = vector.broadcast %2 : vector<32x1xf32> to vector<32x128xf32>
    %5 = vector.broadcast %0 : vector<1x128xf32> to vector<32x128xf32>
    %6 = arith.mulf %4, %5 : vector<32x128xf32>
    %7 = vector.broadcast %3 : vector<32x1xf32> to vector<32x128xf32>
    %8 = arith.addf %6, %7 : vector<32x128xf32>
    %cst = arith.constant 0.000000e+00 : f32
    %9 = vector.broadcast %cst : f32 to vector<32x128xf32>
    %10 = arith.maximumf %8, %9 : vector<32x128xf32>
    %c0_3 = arith.constant 0 : index
    %c0_4 = arith.constant 0 : index
    %11 = vector.load %arg3[%c0_3, %c0_4] : memref<32x33xf32, #tpu.memory_space<vmem>>, vector<32x33xf32>
    %12 = vector.extract_strided_slice %11 {offsets = [0, 0], sizes = [32, 32], strides = [1, 1]} : vector<32x33xf32> to vector<32x32xf32>
    %13 = vector.extract_strided_slice %11 {offsets = [0, 32], sizes = [32, 1], strides = [1, 1]} : vector<32x33xf32> to vector<32x1xf32>
    %cst_5 = arith.constant dense<0.000000e+00> : vector<32x128xf32>
    %14 = tpu.matmul %12, %10, %cst_5 {dimension_numbers = #tpu.dot_dimension_numbers<[1], [0], [0], [1], [0, 0, 1, 1], [], []>} : vector<32x32xf32>, vector<32x128xf32>, vector<32x128xf32> -> vector<32x128xf32>
    %15 = vector.broadcast %13 : vector<32x1xf32> to vector<32x128xf32>
    %16 = arith.addf %14, %15 : vector<32x128xf32>
    %cst_6 = arith.constant 0.000000e+00 : f32
    %17 = vector.broadcast %cst_6 : f32 to vector<32x128xf32>
    %18 = arith.maximumf %16, %17 : vector<32x128xf32>
    %c0_7 = arith.constant 0 : index
    %c0_8 = arith.constant 0 : index
    %19 = vector.load %arg4[%c0_7, %c0_8] : memref<1x33xf32, #tpu.memory_space<vmem>>, vector<1x33xf32>
    %20 = vector.extract_strided_slice %19 {offsets = [0, 0], sizes = [1, 32], strides = [1, 1]} : vector<1x33xf32> to vector<1x32xf32>
    %21 = vector.extract_strided_slice %19 {offsets = [0, 32], sizes = [1, 1], strides = [1, 1]} : vector<1x33xf32> to vector<1x1xf32>
    %cst_9 = arith.constant dense<0.000000e+00> : vector<1x128xf32>
    %22 = tpu.matmul %20, %18, %cst_9 {dimension_numbers = #tpu.dot_dimension_numbers<[1], [0], [0], [1], [0, 0, 1, 1], [], []>} : vector<1x32xf32>, vector<32x128xf32>, vector<1x128xf32> -> vector<1x128xf32>
    %23 = vector.broadcast %21 : vector<1x1xf32> to vector<1x128xf32>
    %24 = arith.addf %22, %23 : vector<1x128xf32>
    %c0_10 = arith.constant 0 : index
    %c0_11 = arith.constant 0 : index
    %25 = vector.load %arg5[%c0_10, %c0_11] : memref<1x128xf32, #tpu.memory_space<vmem>>, vector<1x128xf32>
    tpu.vector_store %arg5[%c0_10, %c0_11], %24 {strides = array<i32>} : memref<1x128xf32, #tpu.memory_space<vmem>>, vector<1x128xf32>,
    return
  }
  func.func @transform_0(%arg0: i32) -> (i32, i32) {
    %c0_i32 = arith.constant 0 : i32
    %c0_i32_0 = arith.constant 0 : i32
    return %c0_i32, %arg0 : i32, i32
  }
  func.func @transform_1(%arg0: i32) -> (i32, i32) {
    %c0_i32 = arith.constant 0 : i32
    %c0_i32_0 = arith.constant 0 : i32
    %c0_i32_1 = arith.constant 0 : i32
    return %c0_i32, %c0_i32_0 : i32, i32
  }
  func.func @transform_2(%arg0: i32) -> (i32, i32) {
    %c0_i32 = arith.constant 0 : i32
    %c0_i32_0 = arith.constant 0 : i32
    %c0_i32_1 = arith.constant 0 : i32
    return %c0_i32, %c0_i32_0 : i32, i32
  }
  func.func @transform_3(%arg0: i32) -> (i32, i32) {
    %c0_i32 = arith.constant 0 : i32
    %c0_i32_0 = arith.constant 0 : i32
    %c0_i32_1 = arith.constant 0 : i32
    return %c0_i32, %c0_i32_0 : i32, i32
  }
  func.func @transform_4(%arg0: i32) -> (i32, i32) {
    %c0_i32 = arith.constant 0 : i32
    %c0_i32_0 = arith.constant 0 : i32
    return %c0_i32, %arg0 : i32, i32
  }
}

</mosaic_0001>

<llo_original>
// kernel: tpu_custom_call.1
$region0: #{tpu_custom_call.1}
  #allocation0 [shape = 'u32[]', space=smem, size = 0x4, offset = 0x4, fixed_abs, tag = 'smem constant byte address 0x4 - core index']
  #allocation1 [shape = 'u32[72,128]{1,0:T(1,128)}', space=vmem, size = 0x9000, scoped, tag = 'internal scratch']
  %s0 = inlined_call_operand.vmem [shape: f32[1,128], index: 0, kind: input, shape index: {}]
  %s1 = inlined_call_operand.vmem [shape: f32[32,2], index: 1, kind: input, shape index: {}]
  %s2 = inlined_call_operand.vmem [shape: f32[32,33], index: 2, kind: input, shape index: {}]
  %s3 = inlined_call_operand.vmem [shape: f32[1,33], index: 3, kind: input, shape index: {}]
  %s4 = inlined_call_operand.hbm [shape: f32[1,128], index: 4, kind: output, shape index: {}]
  %s5 = sld [smem:[#allocation0]]
  $region26: #{tpu_custom_call.1} parent=0
    _
  %s7 = ssub.s32 1, %s5
  %s8 = scalar_select 0, %s7, %s5
  $region1: #{tpu_custom_call.1} parent=0
    #allocation2 [shape = 'u8[512]{0}', space=vmem, size = 0x400, scoped, tag = 'output window, operand 0, single buffered']
    #allocation3 [shape = 's32[1]{0}', space=sflag, size = 0x4, scoped, tag = 'scoped memory for tpu_custom_call.1']
    %9 = vsyncpa [#allocation3], 0
    // Predicated region
    $region2: #{tpu_custom_call.1} parent=1 // pred_check
      _
    $region3: #{tpu_custom_call.1} parent=1 // pred_check_branch
      %11 = sbr.rel (0) target = $region5
    $region4: #{tpu_custom_call.1} parent=1 // pred_region
      _
    $region5: #{tpu_custom_call.1} parent=1 // pred_fallthru
      _
    // Predicated region
    $region6: #{tpu_custom_call.1} parent=1 // pred_check
      _
    $region7: #{tpu_custom_call.1} parent=1 // pred_check_branch
      %13 = sbr.rel (0) target = $region9
    $region8: #{tpu_custom_call.1} parent=1 // pred_region
      _
    $region9: #{tpu_custom_call.1} parent=1 // pred_fallthru
      _
    // Predicated region
    $region10: #{tpu_custom_call.1} parent=1 // pred_check
      _
    $region11: #{tpu_custom_call.1} parent=1 // pred_check_branch
      %15 = sbr.rel (0) target = $region13
    $region12: #{tpu_custom_call.1} parent=1 // pred_region
      _
    $region13: #{tpu_custom_call.1} parent=1 // pred_fallthru
      _
    // Predicated region
    $region14: #{tpu_custom_call.1} parent=1 // pred_check
      _
    $region15: #{tpu_custom_call.1} parent=1 // pred_check_branch
      %17 = sbr.rel (0) target = $region17
    $region16: #{tpu_custom_call.1} parent=1 // pred_region
      _
    $region17: #{tpu_custom_call.1} parent=1 // pred_fallthru
      _
    %v18 = vld [vmem:[%s0] sm:$0x1]
    %v19 = vld [vmem:[%s1] sm:$0xff]
    %v20 = vld [vmem:[%s1 + $0x8] sm:$0xff]
    %v21 = vld [vmem:[%s1 + $0x10] sm:$0xff]
    %v22 = vld [vmem:[%s1 + $0x18] sm:$0xff]
    %24 = vset.pattern.permute.xlu0 0
    %25 = vperm.xlu0 %24, %v19
    %v26 = vpop.permute.xlu0 %25
    %29 = vset.pattern.permute.xlu0 0
    %30 = vperm.xlu0 %29, %v20
    %v31 = vpop.permute.xlu0 %30
    %34 = vset.pattern.permute.xlu0 0
    %35 = vperm.xlu0 %34, %v21
    %v36 = vpop.permute.xlu0 %35
    %39 = vset.pattern.permute.xlu0 0
    %40 = vperm.xlu0 %39, %v22
    %v41 = vpop.permute.xlu0 %40
    %v44 = vperm.slane %v18, 0
    %v46 = vmul.f32 %v26, %v44
    %v47 = vmul.f32 %v31, %v44
    %v48 = vmul.f32 %v36, %v44
    %v49 = vmul.f32 %v41, %v44
    %50 = vset.pattern.permute.xlu0 1
    %51 = vperm.xlu0 %50, %v19
    %v52 = vpop.permute.xlu0 %51
    %54 = vset.pattern.permute.xlu0 1
    %55 = vperm.xlu0 %54, %v20
    %v56 = vpop.permute.xlu0 %55
    %58 = vset.pattern.permute.xlu0 1
    %59 = vperm.xlu0 %58, %v21
    %v60 = vpop.permute.xlu0 %59
    %62 = vset.pattern.permute.xlu0 1
    %63 = vperm.xlu0 %62, %v22
    %v64 = vpop.permute.xlu0 %63
    %v66 = vadd.f32 %v46, %v52
    %v67 = vadd.f32 %v47, %v56
    %v68 = vadd.f32 %v48, %v60
    %v69 = vadd.f32 %v49, %v64
    %v70 = vmax.f32 %v66, 0.0
    %v71 = vmax.f32 %v67, 0.0
    %v72 = vmax.f32 %v68, 0.0
    %v73 = vmax.f32 %v69, 0.0
    %v74 = vld [vmem:[%s2] sm:$0xff]
    %v75 = vld [vmem:[%s2 + $0x8] sm:$0xff]
    %v76 = vld [vmem:[%s2 + $0x10] sm:$0xff]
    %v77 = vld [vmem:[%s2 + $0x18] sm:$0xff]
    %79 = vset.pattern.permute.xlu0 32
    %80 = vperm.xlu0 %79, %v74
    %v81 = vpop.permute.xlu0 %80
    %84 = vset.pattern.permute.xlu0 32
    %85 = vperm.xlu0 %84, %v75
    %v86 = vpop.permute.xlu0 %85
    %89 = vset.pattern.permute.xlu0 32
    %90 = vperm.xlu0 %89, %v76
    %v91 = vpop.permute.xlu0 %90
    %94 = vset.pattern.permute.xlu0 32
    %95 = vperm.xlu0 %94, %v77
    %v96 = vpop.permute.xlu0 %95
    %vm98 = vcmask 261120
    %v99 = vsel %vm98, %v74, 0
    %v101 = vsel %vm98, %v75, 0
    %v103 = vsel %vm98, %v76, 0
    %v105 = vsel %vm98, %v77, 0
    %107 = vmatpush.msra.mxu0 0.0
    %108 = vmatpush.msra.mxu0 0.0
    %109 = vmatpush.msra.mxu0 0.0
    %110 = vmatpush.msra.mxu0 0.0
    %111 = vmatpush.msra.mxu0 0.0
    %112 = vmatpush.msra.mxu0 0.0
    %113 = vmatpush.msra.mxu0 0.0
    %114 = vmatpush.msra.mxu0 0.0
    %115 = vmatpush.msra.mxu0 0.0
    %116 = vmatpush.msra.mxu0 0.0
    %117 = vmatpush.msra.mxu0 0.0
    %118 = vmatpush.msra.mxu0 0.0
    %119 = vmatpush.msra.mxu0 %v73
    %120 = vmatpush.msra.mxu0 %v72
    %121 = vmatpush.msra.mxu0 %v71
    %122 = vmatpush.msra.mxu0 %v70
    %123 = vmatmul.f32.gmra.mxu0 %v99
    %v124 = vpop.f32.mrf.mxu0
    %v125 = vadd.f32 %v81, %v124
    %126 = vmatmul.f32.gmra.mxu0 %v101
    %v127 = vpop.f32.mrf.mxu0
    %v128 = vadd.f32 %v86, %v127
    %129 = vmatmul.f32.gmra.mxu0 %v103
    %v130 = vpop.f32.mrf.mxu0
    %v131 = vadd.f32 %v91, %v130
    %132 = vmatmul.f32.gmra.mxu0 %v105
    %v133 = vpop.f32.mrf.mxu0
    %v134 = vadd.f32 %v96, %v133
    %135 = vdwg.mxu0
    %v136 = vmax.f32 %v125, 0.0
    %v137 = vmax.f32 %v128, 0.0
    %v138 = vmax.f32 %v131, 0.0
    %v139 = vmax.f32 %v134, 0.0
    %v140 = vld [vmem:[%s3] sm:$0x1]
    %142 = vset.pattern.permute.xlu0 32
    %143 = vperm.xlu0 %142, %v140
    %v144 = vpop.permute.xlu0 %143
    %v146 = vperm.slane %v144, 0
    %v147 = vsel %vm98, %v140, 0
    %149 = vmatpush.msra.mxu0 0.0
    %150 = vmatpush.msra.mxu0 0.0
    %151 = vmatpush.msra.mxu0 0.0
    %152 = vmatpush.msra.mxu0 0.0
    %153 = vmatpush.msra.mxu0 0.0
    %154 = vmatpush.msra.mxu0 0.0
    %155 = vmatpush.msra.mxu0 0.0
    %156 = vmatpush.msra.mxu0 0.0
    %157 = vmatpush.msra.mxu0 0.0
    %158 = vmatpush.msra.mxu0 0.0
    %159 = vmatpush.msra.mxu0 0.0
    %160 = vmatpush.msra.mxu0 0.0
    %161 = vmatpush.msra.mxu0 %v139
    %162 = vmatpush.msra.mxu0 %v138
    %163 = vmatpush.msra.mxu0 %v137
    %164 = vmatpush.msra.mxu0 %v136
    %165 = vmatmul.f32.gmra.mxu0 %v147
    %v166 = vpop.f32.mrf.mxu0
    %v167 = vadd.f32 %v146, %v166
    %168 = vdwg.mxu0
    %169 = vst [vmem:[#allocation2] sm:$0x1] %v167
    // Predicated region
    $region18: #{tpu_custom_call.1} parent=1 // pred_check
      _
    $region19: #{tpu_custom_call.1} parent=1 // pred_check_branch
      %171 = sbr.rel (0) target = $region21
    $region20: #{tpu_custom_call.1} parent=1 // pred_region
      %173 = vsyncadd [#allocation3], 0
      %s175 = sshll.u32 [#allocation2], 4
      %s176 = int_to_ptr.vmem [resolvable:$true] %s175
      %s177 = sshll.u32 %s4, 4
      %s178 = int_to_ptr.hbm [resolvable:$true] %s177
      %180 = dma.vmem_to_hbm [thread:$0]  %s176, 16, %s178, [#allocation3]
    $region21: #{tpu_custom_call.1} parent=1 // pred_fallthru
      _
    // Predicated region
    $region22: #{tpu_custom_call.1} parent=1 // pred_check
      _
    $region23: #{tpu_custom_call.1} parent=1 // pred_check_branch
      %182 = sbr.rel (0) target = $region25
    $region24: #{tpu_custom_call.1} parent=1 // pred_region
      %184 = dma.done [#allocation3], 16
    $region25: #{tpu_custom_call.1} parent=1 // pred_fallthru
      _
    %185 = vsyncpa [#allocation3], 1

</llo_original>
